<compile_context>
chip_gen: v6e
topology: v6e:2x2x1
jax: 0.10.0
libtpu: 0.0.40
codegen_flags: <defaults>
</compile_context>

<pallas_src>
import functools

import jax
import jax.numpy as jnp
from jax.experimental import pallas as pl
from jax.experimental.pallas import tpu as pltpu


# ---------------------------------------------------------------------------
# Kernel bodies (all tensors are feature-major: (features, batch_tile))
# ---------------------------------------------------------------------------

def _sigmoid_eup(z):
    # sigmoid(z) = 0.5 * tanh(z/2) + 0.5 : one EUP transcendental, no divide.
    return 0.5 * jnp.tanh(0.5 * z) + 0.5


def _hidden1(x_ref, w1_ref, b1_ref):
    # Input layer, K = 2: two VPU broadcast-FMAs instead of a degenerate
    # (TB, 2) x (2, hid) MXU matmul.
    x = x_ref[...]                      # (2, TB)   batch on lanes
    w1 = w1_ref[...]                    # (hid, 2)
    z = (w1[:, 0:1] * x[0:1, :]         # (hid,1)*(1,TB) -> (hid, TB)
         + w1[:, 1:2] * x[1:2, :]
         + b1_ref[...])                 # (hid, 1) broadcast over lanes
    return jnp.tanh(z)                  # (hid, TB)


def _out_layer(h, w3_ref, b3_ref):
    # Output layer, N = 1: sublane (XLU) reduction instead of an N=1 matmul.
    z = jnp.sum(w3_ref[...] * h, axis=0, keepdims=True) + b3_ref[0, 0]
    return _sigmoid_eup(z)              # (1, TB) lane-dense


def _mlp1_kernel(x_ref, w1_ref, b1_ref, w3_ref, b3_ref, o_ref):
    h = _hidden1(x_ref, w1_ref, b1_ref)
    o_ref[...] = _out_layer(h, w3_ref, b3_ref)


def _mlp2_kernel(x_ref, w1_ref, b1_ref, w2_ref, b2_ref, w3_ref, b3_ref, o_ref,
                 *, mxu_bf16):
    h = _hidden1(x_ref, w1_ref, b1_ref)
    w2 = w2_ref[...]
    if mxu_bf16:
        # bf16 operands, f32 accumulation: native MXU rate on v5e/v6e/v7x and
        # half the resident-w2 VMEM footprint.  Opt-in (loosens tolerance).
        w2 = w2.astype(jnp.bfloat16)
        h = h.astype(jnp.bfloat16)
    # The only matmul worth the MXU: (hid, hid) @ (hid, TB), f32 accumulate.
    h = jnp.tanh(jnp.dot(w2, h, preferred_element_type=jnp.float32)
                 + b2_ref[...])
    o_ref[...] = _out_layer(h, w3_ref, b3_ref)


# ---------------------------------------------------------------------------
# Parameters (feature-major, torch-like (out, in) weights; w3 stored (hid, 1))
# ---------------------------------------------------------------------------

def init_params(key, layer, hid, dtype=jnp.float32):
    # Keep hid a multiple of 8 (sublane width); multiples of 128/256 make the
    # layer==2 MXU matmul fully dense as well.
    assert layer in (1, 2)
    keys = jax.random.split(key, 6)
    params = {
        "w1": jax.random.normal(keys[0], (hid, 2), dtype) * 0.5,   # (out, in)
        "b1": jax.random.normal(keys[1], (hid, 1), dtype) * 0.1,
        "w3": jax.random.normal(keys[2], (hid, 1), dtype) * 0.5,   # (in, out=1)
        "b3": jax.random.normal(keys[3], (1, 1), dtype) * 0.1,
    }
    if layer == 2:
        params["w2"] = jax.random.normal(keys[4], (hid, hid), dtype) * 0.5
        params["b2"] = jax.random.normal(keys[5], (hid, 1), dtype) * 0.1
    return params


# ---------------------------------------------------------------------------
# Wrapper
# ---------------------------------------------------------------------------

def _round_up(v, m):
    return (v + m - 1) // m * m


@functools.partial(jax.jit, static_argnames=("layer", "tb", "mxu_bf16"))
def network_forward(x, params, *, layer, tb=None, mxu_bf16=False):
    """Pallas forward pass.  x: (batch, 2) float32 -> (batch, 1) float32."""
    n = x.shape[0]
    hid = params["w1"].shape[0]

    # ---- batch-tile / grid selection -------------------------------------
    # Big tiles amortize the ~0.35 us fixed per-grid-step overhead.  The cap
    # keeps each (hid, tb) f32 temporary <= ~4 MiB so double-buffered I/O +
    # resident weights + Mosaic temporaries fit comfortably even in v7x's
    # 64 MiB VMEM.  tb is always a multiple of 128 (lane width) unless the
    # whole batch fits in a single sub-128 block (block == full array dims).
    slab_cap = (4 << 20) // (4 * max(hid, 8))           # lanes per (hid, tb) slab
    tb_cap = max(128, min(32768, (slab_cap // 128) * 128))
    if tb is not None:
        tb = max(128, _round_up(int(tb), 128))          # validate user tile
    elif n <= 128:
        tb = n                                          # single full-array block
    else:
        n_lanes = int(pl.cdiv(n, 128))
        # Even number of grid steps >= 2 so the "parallel" batch axis can
        # shard across both TensorCores on v7x.
        steps = max(2, int(pl.cdiv(n_lanes * 128, tb_cap)))
        steps += steps % 2
        tb = 128 * int(pl.cdiv(n_lanes, steps))
    grid = (int(pl.cdiv(n, tb)),)

    # Feature-major input slab.  No zero padding: Pallas masks the partial
    # last block (garbage lanes never reach HBM — every lane is independent).
    xt = x.astype(jnp.float32).T                        # (2, n)

    x_spec = pl.BlockSpec((2, tb), lambda i: (0, i))
    out_spec = pl.BlockSpec((1, tb), lambda i: (0, i))            # lane-dense
    const = lambda shape: pl.BlockSpec(shape, lambda i: (0, 0))   # resident
    smem = pl.BlockSpec(memory_space=pltpu.MemorySpace.SMEM)      # scalar b3

    if layer == 1:
        kernel = _mlp1_kernel
        args = (xt, params["w1"], params["b1"], params["w3"], params["b3"])
        in_specs = [x_spec,
                    const((hid, 2)), const((hid, 1)),
                    const((hid, 1)), smem]
    else:
        kernel = functools.partial(_mlp2_kernel, mxu_bf16=mxu_bf16)
        args = (xt,
                params["w1"], params["b1"],
                params["w2"], params["b2"],
                params["w3"], params["b3"])
        in_specs = [x_spec,
                    const((hid, 2)), const((hid, 1)),
                    const((hid, hid)), const((hid, 1)),
                    const((hid, 1)), smem]

    # VMEM budget: double-buffered x/out blocks + double-buffered resident
    # weights + headroom for materialized (hid, tb) temporaries.
    weight_bytes = 4 * (hid * 2 + hid + hid + 1
                        + (hid * hid + hid if layer == 2 else 0))
    vmem_need = (2 * (2 * tb * 4 + 8 * tb * 4)
                 + 2 * weight_bytes
                 + 6 * hid * tb * 4)
    vmem_limit = int(min(max(vmem_need + (4 << 20), 32 << 20), 48 << 20))

    flops = 2 * n * (2 * hid + hid + (hid * hid if layer == 2 else 0))
    transcendentals = n * (layer * hid + 1)
    bytes_accessed = 4 * n * 3 + weight_bytes

    out = pl.pallas_call(
        kernel,
        out_shape=jax.ShapeDtypeStruct((1, n), jnp.float32),
        grid=grid,
        in_specs=in_specs,
        out_specs=out_spec,
        compiler_params=pltpu.CompilerParams(
            dimension_semantics=("parallel",),
            vmem_limit_bytes=vmem_limit),
        cost_estimate=pl.CostEstimate(
            flops=flops,
            transcendentals=transcendentals,
            bytes_accessed=bytes_accessed),
    )(*args)

    return out.reshape(n, 1)            # free view of the (1, n) slab


def _reference_forward(x, params, layer):
    h = jnp.tanh(x @ params["w1"].T + params["b1"].T)
    if layer == 2:
        h = jnp.tanh(h @ params["w2"].T + params["b2"].T)
    z = h @ params["w3"] + params["b3"]
    return 1.0 / (1.0 + jnp.exp(-z))


if __name__ == "__main__":
    key = jax.random.PRNGKey(0)
    k_x, k_x2, k_p1, k_p2 = jax.random.split(key, 4)

    batch, hid = 8, 32
    x = jax.random.normal(k_x, (batch, 2), jnp.float32)

    # layer == 1 variant (single full-array block, sub-128 lane width)
    params1 = init_params(k_p1, layer=1, hid=hid)
    out1 = jax.block_until_ready(network_forward(x, params1, layer=1))
    ref1 = _reference_forward(x, params1, 1)
    assert out1.shape == (batch, 1)
    assert jnp.allclose(out1, ref1, atol=1e-5, rtol=1e-5)

    # layer == 2 variant
    params2 = init_params(k_p2, layer=2, hid=hid)
    out2 = jax.block_until_ready(network_forward(x, params2, layer=2))
    ref2 = _reference_forward(x, params2, 2)
    assert out2.shape == (batch, 1)
    assert jnp.allclose(out2, ref2, atol=1e-5, rtol=1e-5)

    # Ragged batch with the auto tile: exercises the even (>=2)-step batch
    # grid, the un-padded partial last block and the resident-weight maps.
    batch3 = 300
    x3 = jax.random.normal(k_x2, (batch3, 2), jnp.float32)
    out3 = jax.block_until_ready(network_forward(x3, params2, layer=2))
    ref3 = _reference_forward(x3, params2, 2)
    assert out3.shape == (batch3, 1)
    assert jnp.allclose(out3, ref3, atol=1e-5, rtol=1e-5)

    # Explicit small tile (3-step grid) + bf16-MXU path (looser tolerance).
    out4 = jax.block_until_ready(
        network_forward(x3, params2, layer=2, tb=128, mxu_bf16=True))
    assert out4.shape == (batch3, 1)
    assert jnp.allclose(out4, ref3, atol=5e-2, rtol=5e-2)

    print("KERNEL_OK")
</pallas_src>

<mosaic_0001>
module attributes {stable_mosaic.version = 11 : i64} {
  func.func @_mlp1_kernel(%arg0: i32, %arg1: memref<2x8xf32, #tpu.memory_space<vmem>>, %arg2: memref<32x2xf32, #tpu.memory_space<vmem>>, %arg3: memref<32x1xf32, #tpu.memory_space<vmem>>, %arg4: memref<32x1xf32, #tpu.memory_space<vmem>>, %arg5: memref<1x1xf32, #tpu.memory_space<smem>>, %arg6: memref<1x8xf32, #tpu.memory_space<vmem>>) attributes {dimension_semantics = [#tpu.dimension_semantics<parallel>], iteration_bounds = array<i64: 1>, scalar_prefetch = 0 : i64, scratch_operands = 0 : i64, tpu.core_type = #tpu.core_type<tc>, window_params = [{transform_indices = @transform_0, window_bounds = array<i64: 2, 8>}, {pipeline_mode = #tpu.pipeline_mode<synchronous>, transform_indices = @transform_1, window_bounds = array<i64: 32, 2>}, {pipeline_mode = #tpu.pipeline_mode<synchronous>, transform_indices = @transform_2, window_bounds = array<i64: 32, 1>}, {pipeline_mode = #tpu.pipeline_mode<synchronous>, transform_indices = @transform_3, window_bounds = array<i64: 32, 1>}, {transform_indices = @transform_4, window_bounds = array<i64: 1, 1>}, {transform_indices = @transform_5, window_bounds = array<i64: 1, 8>}]} {
    %c0 = arith.constant 0 : index
    %c0_0 = arith.constant 0 : index
    %0 = vector.load %arg1[%c0, %c0_0] : memref<2x8xf32, #tpu.memory_space<vmem>>, vector<2x8xf32>
    %c0_1 = arith.constant 0 : index
    %c0_2 = arith.constant 0 : index
    %1 = vector.load %arg2[%c0_1, %c0_2] : memref<32x2xf32, #tpu.memory_space<vmem>>, vector<32x2xf32>
    %2 = vector.extract_strided_slice %1 {offsets = [0, 0], sizes = [32, 1], strides = [1, 1]} : vector<32x2xf32> to vector<32x1xf32>
    %3 = vector.extract_strided_slice %0 {offsets = [0, 0], sizes = [1, 8], strides = [1, 1]} : vector<2x8xf32> to vector<1x8xf32>
    %4 = vector.broadcast %2 : vector<32x1xf32> to vector<32x8xf32>
    %5 = vector.broadcast %3 : vector<1x8xf32> to vector<32x8xf32>
    %6 = arith.mulf %4, %5 : vector<32x8xf32>
    %7 = vector.extract_strided_slice %1 {offsets = [0, 1], sizes = [32, 1], strides = [1, 1]} : vector<32x2xf32> to vector<32x1xf32>
    %8 = vector.extract_strided_slice %0 {offsets = [1, 0], sizes = [1, 8], strides = [1, 1]} : vector<2x8xf32> to vector<1x8xf32>
    %9 = vector.broadcast %7 : vector<32x1xf32> to vector<32x8xf32>
    %10 = vector.broadcast %8 : vector<1x8xf32> to vector<32x8xf32>
    %11 = arith.mulf %9, %10 : vector<32x8xf32>
    %12 = arith.addf %6, %11 : vector<32x8xf32>
    %c0_3 = arith.constant 0 : index
    %c0_4 = arith.constant 0 : index
    %13 = vector.load %arg3[%c0_3, %c0_4] : memref<32x1xf32, #tpu.memory_space<vmem>>, vector<32x1xf32>
    %14 = vector.broadcast %13 : vector<32x1xf32> to vector<32x8xf32>
    %15 = arith.addf %12, %14 : vector<32x8xf32>
    %16 = math.tanh %15 : vector<32x8xf32>
    %c0_5 = arith.constant 0 : index
    %c0_6 = arith.constant 0 : index
    %17 = vector.load %arg4[%c0_5, %c0_6] : memref<32x1xf32, #tpu.memory_space<vmem>>, vector<32x1xf32>
    %18 = vector.broadcast %17 : vector<32x1xf32> to vector<32x8xf32>
    %19 = arith.mulf %18, %16 : vector<32x8xf32>
    %cst = arith.constant dense<0.000000e+00> : vector<8xf32>
    %20 = vector.multi_reduction <add>, %19, %cst [0] : vector<32x8xf32> to vector<8xf32>
    %21 = vector.shape_cast %20 : vector<8xf32> to vector<1x8xf32>
    %c0_7 = arith.constant 0 : index
    %c0_8 = arith.constant 0 : index
    %22 = memref.load %arg5[%c0_7, %c0_8] : memref<1x1xf32, #tpu.memory_space<smem>>
    %23 = vector.broadcast %22 : f32 to vector<1x8xf32>
    %24 = arith.addf %21, %23 : vector<1x8xf32>
    %cst_9 = arith.constant 5.000000e-01 : f32
    %25 = vector.broadcast %cst_9 : f32 to vector<1x8xf32>
    %26 = arith.mulf %25, %24 : vector<1x8xf32>
    %27 = math.tanh %26 : vector<1x8xf32>
    %cst_10 = arith.constant 5.000000e-01 : f32
    %28 = vector.broadcast %cst_10 : f32 to vector<1x8xf32>
    %29 = arith.mulf %28, %27 : vector<1x8xf32>
    %cst_11 = arith.constant 5.000000e-01 : f32
    %30 = vector.broadcast %cst_11 : f32 to vector<1x8xf32>
    %31 = arith.addf %29, %30 : vector<1x8xf32>
    %c0_12 = arith.constant 0 : index
    %c0_13 = arith.constant 0 : index
    %32 = vector.load %arg6[%c0_12, %c0_13] : memref<1x8xf32, #tpu.memory_space<vmem>>, vector<1x8xf32>
    tpu.vector_store %arg6[%c0_12, %c0_13], %31 {strides = array<i32>} : memref<1x8xf32, #tpu.memory_space<vmem>>, vector<1x8xf32>,
    return
  }
  func.func @transform_0(%arg0: i32) -> (i32, i32) {
    %c0_i32 = arith.constant 0 : i32
    %c0_i32_0 = arith.constant 0 : i32
    return %c0_i32, %arg0 : i32, i32
  }
  func.func @transform_1(%arg0: i32) -> (i32, i32) {
    %c0_i32 = arith.constant 0 : i32
    %c0_i32_0 = arith.constant 0 : i32
    %c0_i32_1 = arith.constant 0 : i32
    return %c0_i32, %c0_i32_0 : i32, i32
  }
  func.func @transform_2(%arg0: i32) -> (i32, i32) {
    %c0_i32 = arith.constant 0 : i32
    %c0_i32_0 = arith.constant 0 : i32
    %c0_i32_1 = arith.constant 0 : i32
    return %c0_i32, %c0_i32_0 : i32, i32
  }
  func.func @transform_3(%arg0: i32) -> (i32, i32) {
    %c0_i32 = arith.constant 0 : i32
    %c0_i32_0 = arith.constant 0 : i32
    %c0_i32_1 = arith.constant 0 : i32
    return %c0_i32, %c0_i32_0 : i32, i32
  }
  func.func @transform_4(%arg0: i32) -> (i32, i32) {
    %c0_i32 = arith.constant 0 : i32
    %c0_i32_0 = arith.constant 0 : i32
    %c0_i32_1 = arith.constant 0 : i32
    return %c0_i32, %c0_i32_0 : i32, i32
  }
  func.func @transform_5(%arg0: i32) -> (i32, i32) {
    %c0_i32 = arith.constant 0 : i32
    %c0_i32_0 = arith.constant 0 : i32
    return %c0_i32, %arg0 : i32, i32
  }
}

</mosaic_0001>

<llo_original>
// kernel: network_forward.1
$region0: #{network_forward.1}
  #allocation0 [shape = 'u32[]', space=smem, size = 0x4, offset = 0x4, fixed_abs, tag = 'smem constant byte address 0x4 - core index']
  #allocation1 [shape = 'u32[144,128]{1,0:T(1,128)}', space=vmem, size = 0x12000, scoped, tag = 'internal scratch']
  #allocation2 [shape = 'f32[1,1]{1,0:T(1,128)S(6)}', space=smem, size = 0x200, scoped, tag = 'scoped memory for network_forward.1']
  %s0 = inlined_call_operand.vmem [shape: f32[2,8], index: 0, kind: input, shape index: {}]
  %s1 = inlined_call_operand.vmem [shape: f32[32,2], index: 1, kind: input, shape index: {}]
  %s2 = inlined_call_operand.vmem [shape: f32[32,1], index: 2, kind: input, shape index: {}]
  %s3 = inlined_call_operand.vmem [shape: f32[32,1], index: 3, kind: input, shape index: {}]
  %s4 = inlined_call_operand.<no memory space> [shape: f32[1,1], index: 4, kind: input, shape index: {}]
  %s5 = inlined_call_operand.hbm [shape: f32[1,8], index: 5, kind: output, shape index: {}]
  %s6 = sld [smem:[#allocation0]]
  $region30: #{network_forward.1} parent=0
    _
  %s8 = ssub.s32 1, %s6
  %s9 = scalar_select 0, %s8, %s6
  %10 = sst [smem:[#allocation2]] %s4
  $region1: #{network_forward.1} parent=0
    #allocation3 [shape = 'u8[512]{0}', space=vmem, size = 0x400, scoped, tag = 'output window, operand 0, single buffered']
    #allocation4 [shape = 's32[1]{0}', space=sflag, size = 0x4, scoped, tag = 'scoped memory for network_forward.1']
    %11 = vsyncpa [#allocation4], 0
    // Predicated region
    $region2: #{network_forward.1} parent=1 // pred_check
      _
    $region3: #{network_forward.1} parent=1 // pred_check_branch
      %13 = sbr.rel (0) target = $region5
    $region4: #{network_forward.1} parent=1 // pred_region
      _
    $region5: #{network_forward.1} parent=1 // pred_fallthru
      _
    // Predicated region
    $region6: #{network_forward.1} parent=1 // pred_check
      _
    $region7: #{network_forward.1} parent=1 // pred_check_branch
      %15 = sbr.rel (0) target = $region9
    $region8: #{network_forward.1} parent=1 // pred_region
      _
    $region9: #{network_forward.1} parent=1 // pred_fallthru
      _
    // Predicated region
    $region10: #{network_forward.1} parent=1 // pred_check
      _
    $region11: #{network_forward.1} parent=1 // pred_check_branch
      %17 = sbr.rel (0) target = $region13
    $region12: #{network_forward.1} parent=1 // pred_region
      _
    $region13: #{network_forward.1} parent=1 // pred_fallthru
      _
    // Predicated region
    $region14: #{network_forward.1} parent=1 // pred_check
      _
    $region15: #{network_forward.1} parent=1 // pred_check_branch
      %19 = sbr.rel (0) target = $region17
    $region16: #{network_forward.1} parent=1 // pred_region
      _
    $region17: #{network_forward.1} parent=1 // pred_fallthru
      _
    // Predicated region
    $region18: #{network_forward.1} parent=1 // pred_check
      _
    $region19: #{network_forward.1} parent=1 // pred_check_branch
      %21 = sbr.rel (0) target = $region21
    $region20: #{network_forward.1} parent=1 // pred_region
      _
    $region21: #{network_forward.1} parent=1 // pred_fallthru
      _
    %v22 = vld [vmem:[%s0] sm:$0x3]
    %v23 = vld [vmem:[%s1] sm:$0xff]
    %v24 = vld [vmem:[%s1 + $0x8] sm:$0xff]
    %v25 = vld [vmem:[%s1 + $0x10] sm:$0xff]
    %v26 = vld [vmem:[%s1 + $0x18] sm:$0xff]
    %28 = vset.pattern.permute.xlu0 0
    %29 = vperm.xlu0 %28, %v23
    %v30 = vpop.permute.xlu0 %29
    %33 = vset.pattern.permute.xlu0 0
    %34 = vperm.xlu0 %33, %v24
    %v35 = vpop.permute.xlu0 %34
    %38 = vset.pattern.permute.xlu0 0
    %39 = vperm.xlu0 %38, %v25
    %v40 = vpop.permute.xlu0 %39
    %43 = vset.pattern.permute.xlu0 0
    %44 = vperm.xlu0 %43, %v26
    %v45 = vpop.permute.xlu0 %44
    %v47 = vlaneseq
    %v48 = vshrl.u32 %v47, 7
    %v49 = vsub.s32 0, %v48
    %v50 = vrot.slane %v22, %v49
    %v51 = vmul.f32 %v30, %v50
    %v52 = vmul.f32 %v35, %v50
    %v53 = vmul.f32 %v40, %v50
    %v54 = vmul.f32 %v45, %v50
    %55 = vset.pattern.permute.xlu0 1
    %56 = vperm.xlu0 %55, %v23
    %v57 = vpop.permute.xlu0 %56
    %59 = vset.pattern.permute.xlu0 1
    %60 = vperm.xlu0 %59, %v24
    %v61 = vpop.permute.xlu0 %60
    %63 = vset.pattern.permute.xlu0 1
    %64 = vperm.xlu0 %63, %v25
    %v65 = vpop.permute.xlu0 %64
    %67 = vset.pattern.permute.xlu0 1
    %68 = vperm.xlu0 %67, %v26
    %v69 = vpop.permute.xlu0 %68
    %v71 = vlaneseq
    %v72 = vshrl.u32 %v71, 7
    %v73 = vsub.s32 1, %v72
    %v74 = vrot.slane %v22, %v73
    %v75 = vmul.f32 %v57, %v74
    %v76 = vmul.f32 %v61, %v74
    %v77 = vmul.f32 %v65, %v74
    %v78 = vmul.f32 %v69, %v74
    %v79 = vadd.f32 %v51, %v75
    %v80 = vadd.f32 %v52, %v76
    %v81 = vadd.f32 %v53, %v77
    %v82 = vadd.f32 %v54, %v78
    %v83 = vld [vmem:[%s2] sm:$0xff]
    %v84 = vld [vmem:[%s2 + $0x8] sm:$0xff]
    %v85 = vld [vmem:[%s2 + $0x10] sm:$0xff]
    %v86 = vld [vmem:[%s2 + $0x18] sm:$0xff]
    %88 = vset.pattern.permute.xlu0 0
    %89 = vperm.xlu0 %88, %v83
    %v90 = vpop.permute.xlu0 %89
    %93 = vset.pattern.permute.xlu0 0
    %94 = vperm.xlu0 %93, %v84
    %v95 = vpop.permute.xlu0 %94
    %98 = vset.pattern.permute.xlu0 0
    %99 = vperm.xlu0 %98, %v85
    %v100 = vpop.permute.xlu0 %99
    %103 = vset.pattern.permute.xlu0 0
    %104 = vperm.xlu0 %103, %v86
    %v105 = vpop.permute.xlu0 %104
    %v107 = vadd.f32 %v79, %v90
    %v108 = vadd.f32 %v80, %v95
    %v109 = vadd.f32 %v81, %v100
    %v110 = vadd.f32 %v82, %v105
    %v111 = vtanh.pop %v107
    %v112 = vtanh.pop %v108
    %v113 = vtanh.pop %v109
    %v114 = vtanh.pop %v110
    %v115 = vld [vmem:[%s3] sm:$0xff]
    %v116 = vld [vmem:[%s3 + $0x8] sm:$0xff]
    %v117 = vld [vmem:[%s3 + $0x10] sm:$0xff]
    %v118 = vld [vmem:[%s3 + $0x18] sm:$0xff]
    %120 = vset.pattern.permute.xlu0 0
    %121 = vperm.xlu0 %120, %v115
    %v122 = vpop.permute.xlu0 %121
    %125 = vset.pattern.permute.xlu0 0
    %126 = vperm.xlu0 %125, %v116
    %v127 = vpop.permute.xlu0 %126
    %130 = vset.pattern.permute.xlu0 0
    %131 = vperm.xlu0 %130, %v117
    %v132 = vpop.permute.xlu0 %131
    %135 = vset.pattern.permute.xlu0 0
    %136 = vperm.xlu0 %135, %v118
    %v137 = vpop.permute.xlu0 %136
    %v139 = vmul.f32 %v122, %v111
    %v140 = vmul.f32 %v127, %v112
    %v141 = vmul.f32 %v132, %v113
    %v142 = vmul.f32 %v137, %v114
    %vm143 = vcmask 64512
    %v144 = vsel %vm143, %v139, 0.0
    %v145 = vsel %vm143, %v140, 0.0
    %v146 = vadd.f32 %v144, %v145
    %v147 = vsel %vm143, %v141, 0.0
    %v148 = vadd.f32 %v146, %v147
    %v149 = vsel %vm143, %v142, 0.0
    %v150 = vadd.f32 %v148, %v149
    %v151 = vrot.slane %v150, 4
    %v152 = vadd.f32 %v150, %v151
    %v153 = vrot.slane %v152, 2
    %v154 = vadd.f32 %v152, %v153
    %v155 = vrot.slane %v154, 1
    %v156 = vadd.f32 %v154, %v155
    %s157 = sld [smem:[#allocation2]]
    %v158 = vstv %s157
    %v159 = vadd.f32 %v156, %v158
    %v160 = vmul.f32 %v159, 0.5
    %v161 = vtanh.pop %v160
    %v162 = vmul.f32 %v161, 0.5
    %v163 = vadd.f32 %v162, 0.5
    %vm164 = vcmask 57344
    %165 = vst.msk [vmem:[#allocation3] sm:$0x1] %vm164, %v163
    // Predicated region
    $region22: #{network_forward.1} parent=1 // pred_check
      _
    $region23: #{network_forward.1} parent=1 // pred_check_branch
      %167 = sbr.rel (0) target = $region25
    $region24: #{network_forward.1} parent=1 // pred_region
      %s169 = ssub.s32 16, 16
      %170 = vsyncadd [#allocation4], %s169
      %s172 = sshll.u32 [#allocation3], 4
      %s173 = int_to_ptr.vmem [resolvable:$true] %s172
      %175 = dma.vmem_to_hbm [thread:$0]  %s173, 16, %s5, [#allocation4]
    $region25: #{network_forward.1} parent=1 // pred_fallthru
      _
    // Predicated region
    $region26: #{network_forward.1} parent=1 // pred_check
      _
    $region27: #{network_forward.1} parent=1 // pred_check_branch
      %177 = sbr.rel (0) target = $region29
    $region28: #{network_forward.1} parent=1 // pred_region
      %178 = dma.done [#allocation4], 16
    $region29: #{network_forward.1} parent=1 // pred_fallthru
      _
    %179 = vsyncpa [#allocation4], 1

</llo_original>
